<compile_context>
chip_gen: v7x
topology: tpu7x:2x2x1
jax: 0.10.0
libtpu: 0.0.40
codegen_flags: <defaults>
</compile_context>

<pallas_src>
import math

import jax
import jax.numpy as jnp
from jax import lax
from jax.experimental import pallas as pl
from jax.experimental.pallas import tpu as pltpu

N = 3  # number of temporal filters (module default)

_VMEM_LIMIT = 32 * 1024 * 1024    # raise v5e's 16 MiB scoped default; == default on v6e/v7x
_VMEM_TARGET = 24 * 1024 * 1024   # tile-planning budget (headroom under the limit)


def _make_tsf_kernel(T, tT, mx):
    """Kernel body.  Grid = (B, C_tiles, T_tiles), time innermost ("arbitrary").

    f_ref : (1, N, tT)  f32 filter-bank block
    v_ref : (1, tC, tT) video block (native dtype)
    o_ref : (1, N, tC)  f32 [mx=False]   or   (1, 1, tC) f32 [mx=True]
    acc   : (N, tC)     f32 VMEM accumulator scratch
    """
    needs_t_mask = (T % tT) != 0

    def kernel(f_ref, v_ref, o_ref, acc_ref):
        t = pl.program_id(2)
        f = f_ref[0]                               # (N, tT), f32
        v = v_ref[0]                               # (tC, tT), native dtype
        if v.dtype != jnp.float32:                 # trace-time; keeps f32 filter math
            v = v.astype(jnp.float32)
        if needs_t_mask:
            # Zero both operands past the true clip length so garbage in the
            # padded region of the last partial time tile cannot contribute.
            col = lax.broadcasted_iota(jnp.int32, (1, tT), 1) + t * tT
            valid = col < T
            f = jnp.where(valid, f, 0.0)
            v = jnp.where(valid, v, 0.0)

        # (N, tT) . (tC, tT)^T -> (N, tC): channel tile on the lane axis,
        # f32 accumulation on the MXU.
        part = lax.dot_general(
            f, v,
            dimension_numbers=(((1,), (1,)), ((), ())),
            preferred_element_type=jnp.float32)

        @pl.when(t == 0)
        def _():
            acc_ref[...] = part

        @pl.when(t > 0)
        def _():
            acc_ref[...] += part

        @pl.when(t == pl.num_programs(2) - 1)
        def _():
            if mx:
                # Fused max over the N filter rows (sublane reduce, XLU).
                o_ref[0] = jnp.max(acc_ref[...], axis=0, keepdims=True)
            else:
                o_ref[0] = acc_ref[...]

    return kernel


def _pick_tiles(C, T, itemsize, nf, target):
    """Pick (channel_tile, time_tile) so the whole VMEM plan fits `target`.

    The plan counts double-buffered video and filter blocks, the (double
    buffered) output block and the f32 accumulator scratch.
    """
    def vmem(tc, tt):
        return (2 * tt * tc * itemsize     # video block, double buffered
                + 2 * tt * nf * 4          # filter block, double buffered
                + 3 * tc * nf * 4)         # output block (x2) + accumulator

    # 1) Whole (C, T) slab per grid step.
    if vmem(C, T) <= target:
        return int(C), int(T)
    # 2) Full-T blocks, tile only the channel (lane) axis.
    if C > 128 and vmem(128, T) <= target:
        tc = (target - 2 * T * nf * 4) // (2 * T * itemsize + 3 * nf * 4)
        tc = (tc // 128) * 128
        return int(max(128, min(tc, C))), int(T)
    # 3) Long clips: tile time too and accumulate across time tiles.
    tc = int(C) if C <= 256 else 256
    tt = (target - 3 * tc * nf * 4) // (2 * (tc * itemsize + nf * 4))
    tt = (tt // 128) * 128
    if tt >= T:
        return tc, int(T)
    return tc, int(max(128, tt))


def _filter_bank(length, center, gamma, T):
    """Normalized Cauchy filter bank (B, N, T) f32; mirrors PyTorch get_filters
    (the delta term is multiplied by zeros there and is omitted)."""
    c = jnp.tanh(center.astype(jnp.float32))                                  # (N,)
    g = jnp.exp(1.5 - 2.0 * jnp.abs(jnp.tanh(gamma.astype(jnp.float32))))     # (N,)
    centers = (length.astype(jnp.float32)[:, None] - 1.0) * (c[None, :] + 1.0) * 0.5
    t = jnp.arange(T, dtype=jnp.float32)
    x = (t[None, None, :] - centers[:, :, None]) / g[None, :, None]
    f = 1.0 / (math.pi * g[None, :, None] * (x * x + 1.0))                    # (B, N, T)
    return f / (jnp.sum(f, axis=2, keepdims=True) + 1e-6)


def tsf_forward(video, length, center, delta, gamma, mx=False, *, _vmem_target=None):
    """video: (B, C, T, 1, 1); length: (B,); params center/delta/gamma: (N,)."""
    del delta  # multiplied by a zero vector in get_filters -> no forward effect
    B, C, T = int(video.shape[0]), int(video.shape[1]), int(video.shape[2])
    Nn = int(center.shape[0])
    v = video.reshape(B, C, T)                               # native dtype, no copy
    f = _filter_bank(length.reshape(B), center, gamma, T)    # (B, Nn, T) f32, tiny

    target = _VMEM_TARGET if _vmem_target is None else int(_vmem_target)
    tC, tT = _pick_tiles(C, T, v.dtype.itemsize, Nn, target)
    num_c, num_t = pl.cdiv(C, tC), pl.cdiv(T, tT)
    out_rows = 1 if mx else Nn

    out = pl.pallas_call(
        _make_tsf_kernel(T, tT, mx),
        out_shape=jax.ShapeDtypeStruct((B, out_rows, C), jnp.float32),
        grid_spec=pltpu.PrefetchScalarGridSpec(
            num_scalar_prefetch=0,
            grid=(B, num_c, num_t),
            in_specs=[
                pl.BlockSpec((1, Nn, tT), lambda b, c, t: (b, 0, t)),   # filters
                pl.BlockSpec((1, tC, tT), lambda b, c, t: (b, c, t)),   # video
            ],
            out_specs=pl.BlockSpec((1, out_rows, tC), lambda b, c, t: (b, 0, c)),
            scratch_shapes=[pltpu.VMEM((Nn, tC), jnp.float32)],
        ),
        compiler_params=pltpu.CompilerParams(
            # B and channel tiles are independent (megacore-shardable even at
            # B == 1); time is the accumulation axis.
            dimension_semantics=("parallel", "parallel", "arbitrary"),
            vmem_limit_bytes=_VMEM_LIMIT,
        ),
        cost_estimate=pl.CostEstimate(
            flops=2 * B * C * Nn * T,
            transcendentals=0,
            bytes_accessed=(B * C * T * v.dtype.itemsize
                            + B * num_c * Nn * T * 4
                            + B * out_rows * C * 4),
        ),
    )(f, v)

    if mx:
        # (B, 1, C) -> (B, C, 1): identical memory order, pure reshape.
        return out.reshape(-1, C, 1)
    # (B, Nn, C) -> (B, C, Nn) -> (B, C*Nn, 1): index c*Nn + j, as in PyTorch.
    return jnp.transpose(out, (0, 2, 1)).reshape(-1, C * Nn, 1)


def _reference(video, length, center, gamma, mx=False):
    """Pure-JAX reference mirroring the PyTorch forward (delta is a no-op)."""
    B, C, T = video.shape[0], video.shape[1], video.shape[2]
    v = video.reshape(B, C, T).astype(jnp.float32)
    c = jnp.tanh(center)[None, :]                                  # (1, N)
    g = jnp.exp(1.5 - 2.0 * jnp.abs(jnp.tanh(gamma)))[None, :]     # (1, N)
    centers = (length[:, None] - 1.0) * (c + 1.0) / 2.0            # (B, N)
    t = jnp.arange(T, dtype=jnp.float32)[None, None, :]
    x = (t - centers[:, :, None]) / g[:, :, None]
    f = 1.0 / (math.pi * g[:, :, None] * (x ** 2 + 1.0))
    f = f / (jnp.sum(f, axis=2, keepdims=True) + 1e-6)
    o = jnp.einsum("bjt,bct->bcj", f, v, precision=jax.lax.Precision.HIGHEST)
    if mx:
        return jnp.max(o, axis=2).reshape(-1, C, 1)
    return o.reshape(-1, C * center.shape[0], 1)


if __name__ == "__main__":
    key = jax.random.PRNGKey(0)
    k1, k2, k3, k4, k5, k6, k7 = jax.random.split(key, 7)

    # deterministic parameter init matching the module's normal_(0, std) calls
    center = 0.5 * jax.random.normal(k1, (N,), jnp.float32)
    delta = 0.01 * jax.random.normal(k2, (N,), jnp.float32)
    gamma = 0.0001 * jax.random.normal(k3, (N,), jnp.float32)

    def check(video, length, mx, tol, **kw):
        out = jax.block_until_ready(
            tsf_forward(video, length, center, delta, gamma, mx=mx, **kw))
        ref = _reference(video, length, center, gamma, mx=mx)
        assert out.shape == ref.shape, (out.shape, ref.shape)
        err = float(jnp.max(jnp.abs(out - ref)))
        assert jnp.allclose(out, ref, atol=tol, rtol=tol), err
        return out

    # --- test 1: module-default toy shape (single block) --------------------
    B, C, T = 2, 4, 16
    video = jax.random.normal(k4, (B, C, T, 1, 1), jnp.float32)
    length = jnp.array([T, T - 4], dtype=jnp.float32)
    check(video, length, mx=False, tol=1e-5)
    check(video, length, mx=True, tol=1e-5)

    # --- test 2: wider shape, still a single lane-dense block ---------------
    B2, C2, T2 = 2, 32, 128
    video2 = jax.random.normal(k5, (B2, C2, T2, 1, 1), jnp.float32)
    length2 = jnp.array([T2, T2 - 17], dtype=jnp.float32)
    check(video2, length2, mx=False, tol=1e-5)

    # --- test 3: channel tiling with a partial last channel tile ------------
    # (small shapes; reduced VMEM target forces the tC=128 tiling path)
    B3, C3, T3 = 2, 300, 256
    video3 = jax.random.normal(k6, (B3, C3, T3, 1, 1), jnp.float32)
    length3 = jnp.array([T3, T3 - 50], dtype=jnp.float32)
    check(video3, length3, mx=False, tol=1e-5, _vmem_target=400_000)
    check(video3, length3, mx=True, tol=1e-5, _vmem_target=400_000)

    # --- test 4: time tiling + in-kernel accumulation + partial time tile ---
    B4, C4, T4 = 1, 8, 4096
    video4 = jax.random.normal(k7, (B4, C4, T4, 1, 1), jnp.float32)
    length4 = jnp.array([T4 - 123], dtype=jnp.float32)
    check(video4, length4, mx=False, tol=1e-4, _vmem_target=120_000)
    check(video4, length4, mx=True, tol=1e-4, _vmem_target=120_000)

    print("KERNEL_OK")
</pallas_src>

<mosaic_0001>
module attributes {stable_mosaic.version = 11 : i64} {
  func.func @kernel(%arg0: i32, %arg1: i32, %arg2: i32, %arg3: memref<1x3x16xf32, #tpu.memory_space<vmem>>, %arg4: memref<1x4x16xf32, #tpu.memory_space<vmem>>, %arg5: memref<1x3x4xf32, #tpu.memory_space<vmem>>, %arg6: memref<3x4xf32, #tpu.memory_space<vmem>>) attributes {dimension_semantics = [#tpu.dimension_semantics<parallel>, #tpu.dimension_semantics<parallel>, #tpu.dimension_semantics<arbitrary>], iteration_bounds = array<i64: 2, 1, 1>, scalar_prefetch = 0 : i64, scratch_operands = 1 : i64, tpu.core_type = #tpu.core_type<tc>, window_params = [{transform_indices = @transform_0, window_bounds = array<i64: 1, 3, 16>}, {transform_indices = @transform_1, window_bounds = array<i64: 1, 4, 16>}, {transform_indices = @transform_2, window_bounds = array<i64: 1, 3, 4>}]} {
    %c0 = arith.constant 0 : index
    %c0_0 = arith.constant 0 : index
    %c0_1 = arith.constant 0 : index
    %0 = vector.load %arg3[%c0, %c0_0, %c0_1] : memref<1x3x16xf32, #tpu.memory_space<vmem>>, vector<1x3x16xf32>
    %1 = vector.shape_cast %0 : vector<1x3x16xf32> to vector<3x16xf32>
    %c0_2 = arith.constant 0 : index
    %c0_3 = arith.constant 0 : index
    %c0_4 = arith.constant 0 : index
    %2 = vector.load %arg4[%c0_2, %c0_3, %c0_4] : memref<1x4x16xf32, #tpu.memory_space<vmem>>, vector<1x4x16xf32>
    %3 = vector.shape_cast %2 : vector<1x4x16xf32> to vector<4x16xf32>
    %cst = arith.constant dense<0.000000e+00> : vector<3x4xf32>
    %4 = tpu.matmul %1, %3, %cst {dimension_numbers = #tpu.dot_dimension_numbers<[1], [1], [0], [0], [0, 0, 1, 0], [], []>} : vector<3x16xf32>, vector<4x16xf32>, vector<3x4xf32> -> vector<3x4xf32>
    %c0_i32 = arith.constant 0 : i32
    %5 = arith.cmpi eq, %arg2, %c0_i32 : i32
    %6 = arith.extui %5 : i1 to i32
    %c0_i32_5 = arith.constant 0 : i32
    %7 = arith.cmpi ne, %6, %c0_i32_5 : i32
    scf.if %7 {
      %c0_10 = arith.constant 0 : index
      %c0_11 = arith.constant 0 : index
      %14 = vector.load %arg6[%c0_10, %c0_11] : memref<3x4xf32, #tpu.memory_space<vmem>>, vector<3x4xf32>
      tpu.vector_store %arg6[%c0_10, %c0_11], %4 {strides = array<i32>} : memref<3x4xf32, #tpu.memory_space<vmem>>, vector<3x4xf32>,
    } else {
    }
    %c0_i32_6 = arith.constant 0 : i32
    %8 = arith.cmpi sgt, %arg2, %c0_i32_6 : i32
    %9 = arith.extui %8 : i1 to i32
    %c0_i32_7 = arith.constant 0 : i32
    %10 = arith.cmpi ne, %9, %c0_i32_7 : i32
    scf.if %10 {
      %c0_10 = arith.constant 0 : index
      %c0_11 = arith.constant 0 : index
      %14 = vector.load %arg6[%c0_10, %c0_11] : memref<3x4xf32, #tpu.memory_space<vmem>>, vector<3x4xf32>
      %15 = arith.addf %14, %4 : vector<3x4xf32>
      %c0_12 = arith.constant 0 : index
      %c0_13 = arith.constant 0 : index
      %16 = vector.load %arg6[%c0_12, %c0_13] : memref<3x4xf32, #tpu.memory_space<vmem>>, vector<3x4xf32>
      tpu.vector_store %arg6[%c0_12, %c0_13], %15 {strides = array<i32>} : memref<3x4xf32, #tpu.memory_space<vmem>>, vector<3x4xf32>,
    } else {
    }
    %c0_i32_8 = arith.constant 0 : i32
    %11 = arith.cmpi eq, %arg2, %c0_i32_8 : i32
    %12 = arith.extui %11 : i1 to i32
    %c0_i32_9 = arith.constant 0 : i32
    %13 = arith.cmpi ne, %12, %c0_i32_9 : i32
    scf.if %13 {
      %c0_10 = arith.constant 0 : index
      %c0_11 = arith.constant 0 : index
      %14 = vector.load %arg6[%c0_10, %c0_11] : memref<3x4xf32, #tpu.memory_space<vmem>>, vector<3x4xf32>
      %c0_12 = arith.constant 0 : index
      %c0_13 = arith.constant 0 : index
      %c0_14 = arith.constant 0 : index
      %15 = vector.load %arg5[%c0_12, %c0_13, %c0_14] : memref<1x3x4xf32, #tpu.memory_space<vmem>>, vector<1x3x4xf32>
      %16 = vector.shape_cast %15 : vector<1x3x4xf32> to vector<3x4xf32>
      %17 = vector.shape_cast %14 : vector<3x4xf32> to vector<1x3x4xf32>
      tpu.vector_store %arg5[%c0_12, %c0_13, %c0_14], %17 {strides = array<i32>} : memref<1x3x4xf32, #tpu.memory_space<vmem>>, vector<1x3x4xf32>,
    } else {
    }
    return
  }
  func.func @transform_0(%arg0: i32, %arg1: i32, %arg2: i32) -> (i32, i32, i32) {
    %c0_i32 = arith.constant 0 : i32
    %c0_i32_0 = arith.constant 0 : i32
    return %arg0, %c0_i32, %arg2 : i32, i32, i32
  }
  func.func @transform_1(%arg0: i32, %arg1: i32, %arg2: i32) -> (i32, i32, i32) {
    %c0_i32 = arith.constant 0 : i32
    return %arg0, %arg1, %arg2 : i32, i32, i32
  }
  func.func @transform_2(%arg0: i32, %arg1: i32, %arg2: i32) -> (i32, i32, i32) {
    %c0_i32 = arith.constant 0 : i32
    %c0_i32_0 = arith.constant 0 : i32
    return %arg0, %c0_i32, %arg1 : i32, i32, i32
  }
}

</mosaic_0001>

<llo_original>
// kernel: tpu_custom_call.1
$region0: #{tpu_custom_call.1}
  #allocation0 [shape = 'u32[]', space=smem, size = 0x4, offset = 0x4, fixed_abs, tag = 'smem constant byte address 0x4 - core index']
  #allocation1 [shape = 'u32[144,128]{1,0:T(1,128)}', space=vmem, size = 0x12000, scoped, tag = 'internal scratch']
  #allocation2 [shape = 'f32[3,4]{1,0:T(4,128)}', space=vmem, size = 0x800, scoped, tag = 'scratch operand']
  %s0 = inlined_call_operand.vmem [shape: f32[2,3,16], index: 0, kind: input, shape index: {}]
  %s1 = inlined_call_operand.vmem [shape: f32[2,4,16], index: 1, kind: input, shape index: {}]
  %s2 = inlined_call_operand.vmem [shape: f32[2,3,4], index: 2, kind: output, shape index: {}]
  %s3 = sld [smem:[#allocation0]]
  $region53: #{tpu_custom_call.1} parent=0
    _
  %s5 = ssub.s32 1, %s3
  %s6 = scalar_select 0, %s5, %s3
  loop: start=0, step=1, limit=4
  $region2: #{tpu_custom_call.1} parent=0 // loop_pre_header
    _
  $region3: #{tpu_custom_call.1} parent=0 // loop_header
    %s8 = sphi 0, %s12
    %p9 = scmp.ge.s32.totalorder %s8, 4
    %s15 = sphi 0, %s34
    %s16 = sphi 0, %s30
    %s17 = sphi 0, %s26
    %s18 = sphi 0, %s15
    %s19 = sphi 0, %s16
    %s20 = sphi 0, %s17
    %s21 = sphi 0, %s18
    %s22 = sphi 0, %s19
    %s23 = sphi 0, %s20
    %s39 = sphi 0, %s41
    %s42 = sphi 0, %s39
    %s43 = sphi 0, %s42
    %s59 = sphi 0, %s43
    %s69 = sphi 0, %s71
    %s72 = sphi 0, %s69
    %s73 = sphi 0, %s72
    %s89 = sphi 0, %s73
    %s97 = sphi 0, %s99
    %s100 = sphi 0, %s97
    %s101 = sphi 0, %s100
    %s117 = sphi 0, %s101
  $region4: #{tpu_custom_call.1} parent=0 // loop_header_branch
    %11 = sbr.rel (%p9) target = $region8
  $region5: #{tpu_custom_call.1} parent=0 // loop_body
    %s13 = ssub.s32 %s8, 1
    %s14 = ssub.s32 %s8, 2
    %s24 = sadd.s32 1, %s17
    %p25 = scmp.ge.s32.totalorder %s24, 1
    %s26 = scalar_select %p25, 0, %s24
    %s27 = sadd.s32 1, %s16
    %s28 = scalar_select %p25, %s27, %s16
    %p29 = scmp.ge.s32.totalorder %s28, 1
    %s30 = scalar_select %p29, 0, %s28
    %s31 = sadd.s32 1, %s15
    %s32 = scalar_select %p29, %s31, %s15
    %p33 = scmp.ge.s32.totalorder %s32, 2
    %s34 = scalar_select %p33, 0, %s32
    %s35 = ssub.s32 %s15, %s34
    %s36 = ssub.s32 %s17, %s26
    %s37 = sor.u32 %s35, %s36
    %p38 = scmp.eq.s32.totalorder %s37, 0
    %s40 = sadd.s32 %s39, 1
    %s41 = scalar_select %p38, %s39, %s40
    %p44 = pneg %p38
    %p45 = scmp.eq.s32.totalorder %s8, 1
    %p46 = por %p44, %p45
    %p47 = scmp.ne.s32.totalorder %s39, %s42
    %p48 = scmp.eq.s32.totalorder %s8, 0
    %p49 = por %p47, %p48
    %p50 = scmp.ne.s32.totalorder %s39, %s42
    %p51 = scmp.eq.s32.totalorder %s13, 1
    %p52 = por %p50, %p51
    %p53 = scmp.ne.s32.totalorder %s42, %s43
    %p54 = scmp.eq.s32.totalorder %s13, 0
    %p55 = por %p53, %p54
    %p56 = scmp.ne.s32.totalorder %s42, %s43
    %p57 = scmp.eq.s32.totalorder %s14, 1
    %p58 = por %p56, %p57
    %p60 = scmp.ne.s32.totalorder %s43, %s59
    %p61 = scmp.eq.s32.totalorder %s14, 0
    %p62 = por %p60, %p61
    %s63 = ssub.s32 %s15, %s34
    %s64 = ssub.s32 %s16, %s30
    %s65 = sor.u32 %s63, %s64
    %s66 = ssub.s32 %s17, %s26
    %s67 = sor.u32 %s65, %s66
    %p68 = scmp.eq.s32.totalorder %s67, 0
    %s70 = sadd.s32 %s69, 1
    %s71 = scalar_select %p68, %s69, %s70
    %p74 = pneg %p68
    %p75 = scmp.eq.s32.totalorder %s8, 1
    %p76 = por %p74, %p75
    %p77 = scmp.ne.s32.totalorder %s69, %s72
    %p78 = scmp.eq.s32.totalorder %s8, 0
    %p79 = por %p77, %p78
    %p80 = scmp.ne.s32.totalorder %s69, %s72
    %p81 = scmp.eq.s32.totalorder %s13, 1
    %p82 = por %p80, %p81
    %p83 = scmp.ne.s32.totalorder %s72, %s73
    %p84 = scmp.eq.s32.totalorder %s13, 0
    %p85 = por %p83, %p84
    %p86 = scmp.ne.s32.totalorder %s72, %s73
    %p87 = scmp.eq.s32.totalorder %s14, 1
    %p88 = por %p86, %p87
    %p90 = scmp.ne.s32.totalorder %s73, %s89
    %p91 = scmp.eq.s32.totalorder %s14, 0
    %p92 = por %p90, %p91
    %s93 = ssub.s32 %s15, %s34
    %s94 = ssub.s32 %s16, %s30
    %s95 = sor.u32 %s93, %s94
    %p96 = scmp.eq.s32.totalorder %s95, 0
    %s98 = sadd.s32 %s97, 1
    %s99 = scalar_select %p96, %s97, %s98
    %p102 = pneg %p96
    %p103 = scmp.eq.s32.totalorder %s8, 1
    %p104 = por %p102, %p103
    %p105 = scmp.ne.s32.totalorder %s97, %s100
    %p106 = scmp.eq.s32.totalorder %s8, 0
    %p107 = por %p105, %p106
    %p108 = scmp.ne.s32.totalorder %s97, %s100
    %p109 = scmp.eq.s32.totalorder %s13, 1
    %p110 = por %p108, %p109
    %p111 = scmp.ne.s32.totalorder %s100, %s101
    %p112 = scmp.eq.s32.totalorder %s13, 0
    %p113 = por %p111, %p112
    %p114 = scmp.ne.s32.totalorder %s100, %s101
    %p115 = scmp.eq.s32.totalorder %s14, 1
    %p116 = por %p114, %p115
    %p118 = scmp.ne.s32.totalorder %s101, %s117
    %p119 = scmp.eq.s32.totalorder %s14, 0
    %p120 = por %p118, %p119
    %p121 = scmp.le.s32.totalorder 1, %s8
    %p122 = scmp.lt.s32.totalorder %s8, 3
    %p123 = pnand %p121, %p122
    %p124 = pneg %p123
    // Predicated region
    $region9: #{tpu_custom_call.1} parent=5 // pred_check
      _
    $region10: #{tpu_custom_call.1} parent=5 // pred_check_branch
      %126 = sbr.rel (%p123) target = $region12
    $region11: #{tpu_custom_call.1} parent=5 // pred_region
      %s127 = ssub.s32 %s8, 1
    $region12: #{tpu_custom_call.1} parent=5 // pred_fallthru
      _
    %p128 = scmp.lt.s32.totalorder %s8, 2
    // Predicated region
    $region13: #{tpu_custom_call.1} parent=5 // pred_check
      %p129 = pneg %p128
    $region14: #{tpu_custom_call.1} parent=5 // pred_check_branch
      %131 = sbr.rel (%p129) target = $region16
    $region15: #{tpu_custom_call.1} parent=5 // pred_region
      // Predicated region
      $region17: #{tpu_custom_call.1} parent=15 // pred_check
        %p132 = pneg %p49
      $region18: #{tpu_custom_call.1} parent=15 // pred_check_branch
        %134 = sbr.rel (%p132) target = $region20
      $region19: #{tpu_custom_call.1} parent=15 // pred_region
        %p135 = scmp.lt.s32.totalorder %s15, 1
        %s136 = scalar_select %p135, %s15, 1
        %p137 = scmp.lt.s32.totalorder %s17, 0
        %s138 = scalar_select %p137, %s17, 0
        %s139 = sadd.s32 %s138, %s136
        %s140 = smul.addr %s139, 4
        %s141 = scalar_lea.vmem %s0, %s140
      $region20: #{tpu_custom_call.1} parent=15 // pred_fallthru
        _
      // Predicated region
      $region21: #{tpu_custom_call.1} parent=15 // pred_check
        %p142 = pneg %p79
      $region22: #{tpu_custom_call.1} parent=15 // pred_check_branch
        %144 = sbr.rel (%p142) target = $region24
      $region23: #{tpu_custom_call.1} parent=15 // pred_region
        %p145 = scmp.lt.s32.totalorder %s15, 1
        %s146 = scalar_select %p145, %s15, 1
        %p147 = scmp.lt.s32.totalorder %s16, 0
        %s148 = scalar_select %p147, %s16, 0
        %p149 = scmp.lt.s32.totalorder %s17, 0
        %s150 = scalar_select %p149, %s17, 0
        %s151 = sadd.s32 %s150, %s148
        %s152 = sadd.s32 %s151, %s146
        %s153 = smul.addr %s152, 4
        %s154 = scalar_lea.vmem %s1, %s153
      $region24: #{tpu_custom_call.1} parent=15 // pred_fallthru
        _
    $region16: #{tpu_custom_call.1} parent=5 // pred_fallthru
      _
    %p155 = scmp.le.s32.totalorder 1, %s8
    %p156 = scmp.lt.s32.totalorder %s8, 3
    %p157 = pnand %p155, %p156
    %p158 = pneg %p157
    // Predicated region
    $region25: #{tpu_custom_call.1} parent=5 // pred_check
      _
    $region26: #{tpu_custom_call.1} parent=5 // pred_check_branch
      %160 = sbr.rel (%p157) target = $region28
    $region27: #{tpu_custom_call.1} parent=5 // pred_region
      %s161 = ssub.s32 %s8, 1
      %p162 = scmp.lt.s32.totalorder %s18, 1
      %s163 = scalar_select %p162, %s18, 1
      %p164 = scmp.lt.s32.totalorder %s20, 0
      %s165 = scalar_select %p164, %s20, 0
      %s166 = sadd.s32 %s165, %s163
      %s167 = smul.addr %s166, 4
      %s168 = scalar_lea.vmem %s0, %s167
      %p169 = pneg %p55
      %p170 = pneg %p52
      %p171 = scmp.lt.s32.totalorder %s18, 1
      %s172 = scalar_select %p171, %s18, 1
      %p173 = scmp.lt.s32.totalorder %s19, 0
      %s174 = scalar_select %p173, %s19, 0
      %p175 = scmp.lt.s32.totalorder %s20, 0
      %s176 = scalar_select %p175, %s20, 0
      %s177 = sadd.s32 %s176, %s174
      %s178 = sadd.s32 %s177, %s172
      %s179 = smul.addr %s178, 4
      %s180 = scalar_lea.vmem %s1, %s179
      %p181 = pneg %p85
      %p182 = pneg %p82
      %p183 = pneg %p113
      %p184 = pneg %p110
      %p185 = scmp.lt.s32.totalorder %s18, 1
      %s186 = scalar_select %p185, %s18, 1
      %p187 = scmp.lt.s32.totalorder %s19, 0
      %s188 = scalar_select %p187, %s19, 0
      %s189 = sadd.s32 %s188, %s186
      %s190 = smul.addr %s189, 4
      %s191 = scalar_lea.vmem %s2, %s190
      %p192 = scmp.lt.s32.totalorder %s18, 1
      %s193 = scalar_select %p192, %s18, 1
      %p194 = scmp.lt.s32.totalorder %s20, 0
      %s195 = scalar_select %p194, %s20, 0
      %s196 = sadd.s32 %s195, %s193
      %s197 = smul.addr %s196, 4
      %s198 = scalar_lea.vmem %s0, %s197
      %p199 = scmp.lt.s32.totalorder %s18, 1
      %s200 = scalar_select %p199, %s18, 1
      %p201 = scmp.lt.s32.totalorder %s19, 0
      %s202 = scalar_select %p201, %s19, 0
      %p203 = scmp.lt.s32.totalorder %s20, 0
      %s204 = scalar_select %p203, %s20, 0
      %s205 = sadd.s32 %s204, %s202
      %s206 = sadd.s32 %s205, %s200
      %s207 = smul.addr %s206, 4
      %s208 = scalar_lea.vmem %s1, %s207
      %p209 = scmp.lt.s32.totalorder %s18, 1
      %s210 = scalar_select %p209, %s18, 1
      %p211 = scmp.lt.s32.totalorder %s19, 0
      %s212 = scalar_select %p211, %s19, 0
      %s213 = sadd.s32 %s212, %s210
      %s214 = smul.addr %s213, 4
      %s215 = scalar_lea.vmem %s2, %s214
      %v216 = vld [vmem:[%s198] sm:$0x7]
      %v217 = vld [vmem:[%s208] sm:$0xf]
      %vm218 = vcmask 130048
      %v220 = vsel %vm218, %v216, 0
      %v223 = vsel %vm218, %v217, 0
      %225 = vmatprep.subr.mxu0 0.0
      %226 = vmatpush1.xpose.msra.mxu0 %v223
      %227 = vmatprep.subr.mxu0 0.0
      %228 = vmatpush1.xpose.msra.mxu0 0.0
      %229 = vmatprep.subr.mxu0 0.0
      %230 = vmatpush1.xpose.msra.mxu0 0.0
      %231 = vmatprep.subr.mxu0 0.0
      %232 = vmatpush1.xpose.msra.mxu0 0.0
      %233 = vmatprep.subr.mxu0 0.0
      %234 = vmatpush1.xpose.msra.mxu0 0.0
      %235 = vmatprep.subr.mxu0 0.0
      %236 = vmatpush1.xpose.msra.mxu0 0.0
      %237 = vmatprep.subr.mxu0 0.0
      %238 = vmatpush1.xpose.msra.mxu0 0.0
      %239 = vmatprep.subr.mxu0 0.0
      %240 = vmatpush1.xpose.msra.mxu0 0.0
      %241 = vmatprep.subr.mxu0 0.0
      %242 = vmatpush1.xpose.msra.mxu0 0.0
      %243 = vmatprep.subr.mxu0 0.0
      %244 = vmatpush1.xpose.msra.mxu0 0.0
      %245 = vmatprep.subr.mxu0 0.0
      %246 = vmatpush1.xpose.msra.mxu0 0.0
      %247 = vmatprep.subr.mxu0 0.0
      %248 = vmatpush1.xpose.msra.mxu0 0.0
      %249 = vmatprep.subr.mxu0 0.0
      %250 = vmatpush1.xpose.msra.mxu0 0.0
      %251 = vmatprep.subr.mxu0 0.0
      %252 = vmatpush1.xpose.msra.mxu0 0.0
      %253 = vmatprep.subr.mxu0 0.0
      %254 = vmatpush1.xpose.msra.mxu0 0.0
      %255 = vmatprep.subr.mxu0 0.0
      %256 = vmatpush1.xpose.msra.mxu0 0.0
      %257 = vmatprep.subr.mxu0 0.0
      %258 = vmatpush1.xpose.msra.mxu0 0.0
      %259 = vmatprep.subr.mxu0 0.0
      %260 = vmatpush1.xpose.msra.mxu0 0.0
      %261 = vmatprep.subr.mxu0 0.0
      %262 = vmatpush1.xpose.msra.mxu0 0.0
      %263 = vmatprep.subr.mxu0 0.0
      %264 = vmatpush1.xpose.msra.mxu0 0.0
      %265 = vmatprep.subr.mxu0 0.0
      %266 = vmatpush1.xpose.msra.mxu0 0.0
      %267 = vmatprep.subr.mxu0 0.0
      %268 = vmatpush1.xpose.msra.mxu0 0.0
      %269 = vmatprep.subr.mxu0 0.0
      %270 = vmatpush1.xpose.msra.mxu0 0.0
      %271 = vmatprep.subr.mxu0 0.0
      %272 = vmatpush1.xpose.msra.mxu0 0.0
      %273 = vmatprep.subr.mxu0 0.0
      %274 = vmatpush1.xpose.msra.mxu0 0.0
      %275 = vmatprep.subr.mxu0 0.0
      %276 = vmatpush1.xpose.msra.mxu0 0.0
      %277 = vmatprep.subr.mxu0 0.0
      %278 = vmatpush1.xpose.msra.mxu0 0.0
      %279 = vmatprep.subr.mxu0 0.0
      %280 = vmatpush1.xpose.msra.mxu0 0.0
      %281 = vmatprep.subr.mxu0 0.0
      %282 = vmatpush1.xpose.msra.mxu0 0.0
      %283 = vmatprep.subr.mxu0 0.0
      %284 = vmatpush1.xpose.msra.mxu0 0.0
      %285 = vmatprep.subr.mxu0 0.0
      %286 = vmatpush1.xpose.msra.mxu0 0.0
      %287 = vmatprep.subr.mxu0 0.0
      %288 = vmatpush1.xpose.msra.mxu0 0.0
      %289 = vmatprep.mubr.f32.mxu0 0.0
      %290 = vmatmul.mubr.f32.gmra.mrb[0].mxu0 %v220
      %v291 = vpop.f32.mrb[0].mxu0
      %v292 = vadd.f32 0.0, %v291
      %v293 = vpop.f32.mrb[0].mxu0
      %294 = vdwg.mxu0
      %p295 = scmp.eq.s32.totalorder %s20, 0
      // Predicated region
      $region29: #{tpu_custom_call.1} parent=27 // pred_check
        %p296 = pneg %p295
      $region30: #{tpu_custom_call.1} parent=27 // pred_check_branch
        %298 = sbr.rel (%p296) target = $region32
      $region31: #{tpu_custom_call.1} parent=27 // pred_region
        %vm299 = vcmask 26624
        %300 = vst.msk [vmem:[#allocation2] sm:$0x7] %vm299, %v292
      $region32: #{tpu_custom_call.1} parent=27 // pred_fallthru
        _
      %p301 = scmp.gt.s32.totalorder %s20, 0
      // Predicated region
      $region33: #{tpu_custom_call.1} parent=27 // pred_check
        %p302 = pneg %p301
      $region34: #{tpu_custom_call.1} parent=27 // pred_check_branch
        %304 = sbr.rel (%p302) target = $region36
      $region35: #{tpu_custom_call.1} parent=27 // pred_region
        %v305 = vld [vmem:[#allocation2] sm:$0x7]
        %v306 = vadd.f32 %v305, %v292
        %vm307 = vcmask 26624
        %308 = vst.msk [vmem:[#allocation2] sm:$0x7] %vm307, %v306
      $region36: #{tpu_custom_call.1} parent=27 // pred_fallthru
        _
      // Predicated region
      $region37: #{tpu_custom_call.1} parent=27 // pred_check
        %p309 = pneg %p295
      $region38: #{tpu_custom_call.1} parent=27 // pred_check_branch
        %311 = sbr.rel (%p309) target = $region40
      $region39: #{tpu_custom_call.1} parent=27 // pred_region
        %v312 = vld [vmem:[#allocation2] sm:$0x7]
        %vm313 = vcmask 26624
        %314 = vst.msk [vmem:[%s215] sm:$0x7] %vm313, %v312
      $region40: #{tpu_custom_call.1} parent=27 // pred_fallthru
        _
      %p315 = scmp.lt.s32.totalorder %s18, 1
      %s316 = scalar_select %p315, %s18, 1
      %p317 = scmp.lt.s32.totalorder %s19, 0
      %s318 = scalar_select %p317, %s19, 0
      %s319 = sadd.s32 %s318, %s316
      %s320 = smul.addr %s319, 4
      %s321 = scalar_lea.vmem %s2, %s320
      // Predicated region
      $region41: #{tpu_custom_call.1} parent=27 // pred_check
        %p322 = pneg %p110
      $region42: #{tpu_custom_call.1} parent=27 // pred_check_branch
        %324 = sbr.rel (%p322) target = $region44
      $region43: #{tpu_custom_call.1} parent=27 // pred_region
        _
      $region44: #{tpu_custom_call.1} parent=27 // pred_fallthru
        _
    $region28: #{tpu_custom_call.1} parent=5 // pred_fallthru
      _
    %p325 = scmp.le.s32.totalorder 2, %s8
    // Predicated region
    $region45: #{tpu_custom_call.1} parent=5 // pred_check
      %p326 = pneg %p325
    $region46: #{tpu_custom_call.1} parent=5 // pred_check_branch
      %328 = sbr.rel (%p326) target = $region48
    $region47: #{tpu_custom_call.1} parent=5 // pred_region
      %s329 = ssub.s32 %s8, 2
      // Predicated region
      $region49: #{tpu_custom_call.1} parent=47 // pred_check
        %p330 = pneg %p116
      $region50: #{tpu_custom_call.1} parent=47 // pred_check_branch
        %332 = sbr.rel (%p330) target = $region52
      $region51: #{tpu_custom_call.1} parent=47 // pred_region
        %p333 = scmp.lt.s32.totalorder %s21, 1
        %s334 = scalar_select %p333, %s21, 1
        %p335 = scmp.lt.s32.totalorder %s22, 0
        %s336 = scalar_select %p335, %s22, 0
        %s337 = sadd.s32 %s336, %s334
        %s338 = smul.addr %s337, 4
        %s339 = scalar_lea.vmem %s2, %s338
      $region52: #{tpu_custom_call.1} parent=47 // pred_fallthru
        _
    $region48: #{tpu_custom_call.1} parent=5 // pred_fallthru
      _
  $region6: #{tpu_custom_call.1} parent=0 // loop_footer
    %s12 = sadd.s32 1, %s8
  $region7: #{tpu_custom_call.1} parent=0 // loop_footer_branch
    %7 = sbr.rel target = $region3
  $region8: #{tpu_custom_call.1} parent=0 // loop_exit
    _

</llo_original>
